<compile_context>
chip_gen: v6e
topology: v6e:2x2x1
jax: 0.10.0
libtpu: 0.0.40
codegen_flags: <defaults>
</compile_context>

<pallas_src>
import jax
import jax.numpy as jnp
from jax.experimental import pallas as pl
from jax.experimental.pallas import tpu as pltpu

_LANE = 128


def _cdiv(a, b):
    return (a + b - 1) // b


def _round_up(x, m):
    return _cdiv(x, m) * m


def _vmem_plan(budget=None, limit=None):
    """Generation-aware VMEM plan: (pipeline-buffer budget, vmem_limit_bytes).

    Explicit overrides are honored; otherwise the plan is picked from the device
    kind at wrapper (trace) time rather than a probe inside the kernel.
    """
    if budget is not None and limit is not None:
        return budget, limit
    try:
        kind = jax.devices()[0].device_kind.lower()
    except Exception:
        kind = ""
    if any(tag in kind for tag in ("v4", "v5", "v6")):
        d_budget, d_limit = 48 * 1024 * 1024, 64 * 1024 * 1024   # 128 MiB VMEM class
    else:
        d_budget, d_limit = 20 * 1024 * 1024, 32 * 1024 * 1024   # v7x (64 MiB) / unknown
    return (d_budget if budget is None else budget,
            d_limit if limit is None else limit)


def _sublane_align(dtype):
    return {4: 8, 2: 16, 1: 32}.get(jnp.dtype(dtype).itemsize, 8)


def _pick_tile_rows(rows, in_row_bytes, out_row_bytes, budget_bytes, align):
    """Rows per grid step: as large as the VMEM budget allows, but keep >= ~8
    grid steps for v7x's two TensorCores and >= ~1024 rows/step so each DMA
    amortises the fixed per-step pipeline overhead."""
    per_row = 2 * (in_row_bytes + out_row_bytes)      # double-buffered in + out
    ts = (budget_bytes // max(per_row, 1)) // align * align
    ts = max(ts, align)
    ts_min_steps = _round_up(_cdiv(rows, 8), align)
    ts = min(ts, max(ts_min_steps, 1024))
    ts = min(ts, _round_up(rows, align))
    return max(ts, align)


def _linear_kernel(x_ref, w_ref, b_ref, o_ref):
    # x_ref: (TS, K) VMEM   w_ref: (K, G) VMEM   b_ref: (1,) SMEM   o_ref: (TS, G)
    acc = jnp.dot(x_ref[...], w_ref[...], preferred_element_type=jnp.float32)
    o_ref[...] = (acc + b_ref[0]).astype(o_ref.dtype)


def _call_linear(x2d, w_mat, bias_f32, *, budget, limit):
    rows, k = x2d.shape
    g = w_mat.shape[1]
    itemsize = jnp.dtype(x2d.dtype).itemsize
    align = _sublane_align(x2d.dtype)
    in_row = _round_up(k, _LANE) * itemsize            # lane-padded VMEM row
    out_row = _round_up(g, _LANE) * itemsize
    ts = _pick_tile_rows(rows, in_row, out_row, budget, align)
    grid = (_cdiv(rows, ts),)                          # ragged last block, no jnp.pad
    return pl.pallas_call(
        _linear_kernel,
        out_shape=jax.ShapeDtypeStruct((rows, g), x2d.dtype),
        grid_spec=pltpu.PrefetchScalarGridSpec(
            num_scalar_prefetch=0,
            grid=grid,
            in_specs=[
                pl.BlockSpec((ts, k), lambda i: (i, 0)),
                pl.BlockSpec((k, g), lambda i: (0, 0)),
                pl.BlockSpec(memory_space=pltpu.MemorySpace.SMEM),
            ],
            out_specs=pl.BlockSpec((ts, g), lambda i: (i, 0)),
        ),
        compiler_params=pltpu.CompilerParams(
            dimension_semantics=("parallel",),
            vmem_limit_bytes=limit,
        ),
        cost_estimate=pl.CostEstimate(
            flops=2 * rows * k * g,
            transcendentals=0,
            bytes_accessed=(rows * k + k * g + rows * g) * itemsize + 4,
        ),
    )(x2d, w_mat, bias_f32)


def _lane_view(n, f, dtype):
    """(row_width, outputs_per_row) for the lane-dense flat view, or None."""
    if jnp.dtype(dtype).itemsize != 4:
        return None                      # packed dtypes: keep the generic row path
    if f < 1 or f > 16 or _LANE % f != 0:
        return None
    g = _LANE // f                       # 64 outputs per 128-lane row for F=2
    if n % g != 0 or n // g == 0:
        return None
    return _LANE, g


def gravity_model_forward(x, weight, bias, *, min_pallas_elems=65536,
                          vmem_budget_bytes=None, vmem_limit_bytes=None):
    """out = x @ weight.T + bias  with weight (1, F), bias (1,)."""
    f = x.shape[-1]
    assert weight.shape == (1, f)
    assert bias.shape == (1,)
    lead = x.shape[:-1]
    x2 = x.reshape(-1, f)
    n = x2.shape[0]
    w_col = weight.reshape(f, 1).astype(x2.dtype)

    # Tiny problems: a Pallas launch plus wrapper ops can't be amortised.
    if n == 0 or n * f < min_pallas_elems:
        out = x2 @ w_col + bias.astype(x2.dtype)
        return out.reshape(lead + (1,))

    budget, limit = _vmem_plan(vmem_budget_bytes, vmem_limit_bytes)
    b32 = bias.astype(jnp.float32)

    lane = _lane_view(n, f, x2.dtype)
    if lane is not None:
        # Small-F lane path: free bitcast reshape of row-major X to (R, 128)
        # (X streamed from HBM exactly once, fully lane-dense DMA) and a single
        # MXU matmul against the block-diagonal kron(I_G, w) that sums each
        # group of F consecutive lanes.  Output block is (TS, G).
        cw, g = lane
        r = (n * f) // cw
        w_mat = jnp.kron(jnp.eye(g, dtype=x2.dtype), w_col)      # (128, G), tiny
        out = _call_linear(x2.reshape(r, cw), w_mat, b32,
                           budget=budget, limit=limit)
        out = out.reshape(n, 1)                                   # free bitcast
    else:
        # Generic row path: (TS, F) tiles streamed once, MXU matvec + bias,
        # ragged last block handled by Pallas masking.
        # TODO(synk): lane-dense (1, TS) output via in-kernel transpose and a
        # K-grid accumulator for very large F; secondary since the X stream
        # dominates HBM traffic.
        out = _call_linear(x2, w_col, b32, budget=budget, limit=limit)
    return out.reshape(lead + (1,))


def init_params(key, dim_features=2, dtype=jnp.float32):
    """Mimic torch.nn.Linear init: uniform(+-1/sqrt(fan_in))."""
    kw, kb = jax.random.split(key)
    bound = 1.0 / (dim_features ** 0.5)
    weight = jax.random.uniform(kw, (1, dim_features), dtype, -bound, bound)
    bias = jax.random.uniform(kb, (1,), dtype, -bound, bound)
    return weight, bias


if __name__ == "__main__":
    key = jax.random.PRNGKey(0)
    k0, k1, k2, k3, k4, k5 = jax.random.split(key, 6)

    # 1) Module default config (dim_features=2, tiny batch) -> fused XLA bypass.
    x0 = jax.random.normal(k0, (8, 2), dtype=jnp.float32)
    w0, b0 = init_params(k1, 2)
    out0 = jax.block_until_ready(gravity_model_forward(x0, w0, b0))
    assert out0.shape == (8, 1)
    assert jnp.allclose(out0, x0 @ w0.T + b0, atol=1e-5, rtol=1e-5)

    # 2) Small-F lane-dense Pallas path (F=2, N % 64 == 0).
    x1 = jax.random.normal(k2, (1024, 2), dtype=jnp.float32)
    w1, b1 = init_params(k3, 2)
    out1 = jax.block_until_ready(
        gravity_model_forward(x1, w1, b1, min_pallas_elems=0))
    assert out1.shape == (1024, 1)
    assert jnp.allclose(out1, x1 @ w1.T + b1, atol=1e-4, rtol=1e-4)

    # 3) Larger-F MXU row path with a ragged last block (N not tile-aligned).
    x2_ = jax.random.normal(k4, (520, 160), dtype=jnp.float32)
    w2, b2 = init_params(k5, 160)
    out2 = jax.block_until_ready(
        gravity_model_forward(x2_, w2, b2, min_pallas_elems=0))
    assert out2.shape == (520, 1)
    assert jnp.allclose(out2, x2_ @ w2.T + b2, atol=1e-4, rtol=1e-4)

    print("KERNEL_OK")
</pallas_src>

<mosaic_0001>
module attributes {stable_mosaic.version = 11 : i64} {
  func.func @_linear_kernel(%arg0: i32, %arg1: memref<16x128xf32, #tpu.memory_space<vmem>>, %arg2: memref<128x64xf32, #tpu.memory_space<vmem>>, %arg3: memref<1xf32, #tpu.memory_space<smem>>, %arg4: memref<16x64xf32, #tpu.memory_space<vmem>>) attributes {dimension_semantics = [#tpu.dimension_semantics<parallel>], iteration_bounds = array<i64: 1>, scalar_prefetch = 0 : i64, scratch_operands = 0 : i64, tpu.core_type = #tpu.core_type<tc>, window_params = [{transform_indices = @transform_0, window_bounds = array<i64: 16, 128>}, {pipeline_mode = #tpu.pipeline_mode<synchronous>, transform_indices = @transform_1, window_bounds = array<i64: 128, 64>}, {transform_indices = @transform_2, window_bounds = array<i64: 1>}, {transform_indices = @transform_3, window_bounds = array<i64: 16, 64>}]} {
    %c0 = arith.constant 0 : index
    %c0_0 = arith.constant 0 : index
    %0 = vector.load %arg1[%c0, %c0_0] : memref<16x128xf32, #tpu.memory_space<vmem>>, vector<16x128xf32>
    %c0_1 = arith.constant 0 : index
    %c0_2 = arith.constant 0 : index
    %1 = vector.load %arg2[%c0_1, %c0_2] : memref<128x64xf32, #tpu.memory_space<vmem>>, vector<128x64xf32>
    %cst = arith.constant dense<0.000000e+00> : vector<16x64xf32>
    %2 = tpu.matmul %0, %1, %cst {dimension_numbers = #tpu.dot_dimension_numbers<[1], [0], [0], [1], [0, 0, 1, 1], [], []>} : vector<16x128xf32>, vector<128x64xf32>, vector<16x64xf32> -> vector<16x64xf32>
    %c0_3 = arith.constant 0 : index
    %3 = memref.load %arg3[%c0_3] : memref<1xf32, #tpu.memory_space<smem>>
    %4 = vector.broadcast %3 : f32 to vector<16x64xf32>
    %5 = arith.addf %2, %4 : vector<16x64xf32>
    %c0_4 = arith.constant 0 : index
    %c0_5 = arith.constant 0 : index
    %6 = vector.load %arg4[%c0_4, %c0_5] : memref<16x64xf32, #tpu.memory_space<vmem>>, vector<16x64xf32>
    tpu.vector_store %arg4[%c0_4, %c0_5], %5 {strides = array<i32>} : memref<16x64xf32, #tpu.memory_space<vmem>>, vector<16x64xf32>,
    return
  }
  func.func @transform_0(%arg0: i32) -> (i32, i32) {
    %c0_i32 = arith.constant 0 : i32
    %c0_i32_0 = arith.constant 0 : i32
    return %arg0, %c0_i32 : i32, i32
  }
  func.func @transform_1(%arg0: i32) -> (i32, i32) {
    %c0_i32 = arith.constant 0 : i32
    %c0_i32_0 = arith.constant 0 : i32
    %c0_i32_1 = arith.constant 0 : i32
    return %c0_i32, %c0_i32_0 : i32, i32
  }
  func.func @transform_2(%arg0: i32) -> i32 {
    %c0_i32 = arith.constant 0 : i32
    %c0_i32_0 = arith.constant 0 : i32
    return %c0_i32 : i32
  }
  func.func @transform_3(%arg0: i32) -> (i32, i32) {
    %c0_i32 = arith.constant 0 : i32
    %c0_i32_0 = arith.constant 0 : i32
    return %arg0, %c0_i32 : i32, i32
  }
}

</mosaic_0001>

<llo_original>
// kernel: tpu_custom_call.1
$region0: #{tpu_custom_call.1}
  #allocation0 [shape = 'u32[]', space=smem, size = 0x4, offset = 0x4, fixed_abs, tag = 'smem constant byte address 0x4 - core index']
  #allocation1 [shape = 'u32[144,128]{1,0:T(1,128)}', space=vmem, size = 0x12000, scoped, tag = 'internal scratch']
  #allocation2 [shape = 'f32[1]{0:T(128)S(6)}', space=smem, size = 0x200, scoped, tag = 'scoped memory for tpu_custom_call.1']
  %s0 = inlined_call_operand.vmem [shape: f32[16,128], index: 0, kind: input, shape index: {}]
  %s1 = inlined_call_operand.vmem [shape: f32[128,64], index: 1, kind: input, shape index: {}]
  %s2 = inlined_call_operand.<no memory space> [shape: f32[1], index: 2, kind: input, shape index: {}]
  %s3 = inlined_call_operand.hbm [shape: f32[16,64], index: 3, kind: output, shape index: {}]
  %s4 = sld [smem:[#allocation0]]
  $region22: #{tpu_custom_call.1} parent=0
    _
  %s6 = ssub.s32 1, %s4
  %s7 = scalar_select 0, %s6, %s4
  %8 = sst [smem:[#allocation2]] %s2
  $region1: #{tpu_custom_call.1} parent=0
    #allocation3 [shape = 'u8[8192]{0}', space=vmem, size = 0x2000, scoped, tag = 'output window, operand 0, single buffered']
    #allocation4 [shape = 's32[1]{0}', space=sflag, size = 0x4, scoped, tag = 'scoped memory for tpu_custom_call.1']
    %9 = vsyncpa [#allocation4], 0
    // Predicated region
    $region2: #{tpu_custom_call.1} parent=1 // pred_check
      _
    $region3: #{tpu_custom_call.1} parent=1 // pred_check_branch
      %11 = sbr.rel (0) target = $region5
    $region4: #{tpu_custom_call.1} parent=1 // pred_region
      _
    $region5: #{tpu_custom_call.1} parent=1 // pred_fallthru
      _
    // Predicated region
    $region6: #{tpu_custom_call.1} parent=1 // pred_check
      _
    $region7: #{tpu_custom_call.1} parent=1 // pred_check_branch
      %13 = sbr.rel (0) target = $region9
    $region8: #{tpu_custom_call.1} parent=1 // pred_region
      _
    $region9: #{tpu_custom_call.1} parent=1 // pred_fallthru
      _
    // Predicated region
    $region10: #{tpu_custom_call.1} parent=1 // pred_check
      _
    $region11: #{tpu_custom_call.1} parent=1 // pred_check_branch
      %15 = sbr.rel (0) target = $region13
    $region12: #{tpu_custom_call.1} parent=1 // pred_region
      _
    $region13: #{tpu_custom_call.1} parent=1 // pred_fallthru
      _
    %v16 = vld [vmem:[%s0] sm:$0xff]
    %v17 = vld [vmem:[%s0 + $0x8] sm:$0xff]
    %v18 = vld [vmem:[%s1] sm:$0xff]
    %v19 = vld [vmem:[%s1 + $0x8] sm:$0xff]
    %v20 = vld [vmem:[%s1 + $0x10] sm:$0xff]
    %v21 = vld [vmem:[%s1 + $0x18] sm:$0xff]
    %v22 = vld [vmem:[%s1 + $0x20] sm:$0xff]
    %v23 = vld [vmem:[%s1 + $0x28] sm:$0xff]
    %v24 = vld [vmem:[%s1 + $0x30] sm:$0xff]
    %v25 = vld [vmem:[%s1 + $0x38] sm:$0xff]
    %v26 = vld [vmem:[%s1 + $0x40] sm:$0xff]
    %v27 = vld [vmem:[%s1 + $0x48] sm:$0xff]
    %v28 = vld [vmem:[%s1 + $0x50] sm:$0xff]
    %v29 = vld [vmem:[%s1 + $0x58] sm:$0xff]
    %v30 = vld [vmem:[%s1 + $0x60] sm:$0xff]
    %v31 = vld [vmem:[%s1 + $0x68] sm:$0xff]
    %v32 = vld [vmem:[%s1 + $0x70] sm:$0xff]
    %v33 = vld [vmem:[%s1 + $0x78] sm:$0xff]
    %s34 = sld [smem:[#allocation2]]
    %v35 = vstv %s34
    %36 = vmatprep.subr.mxu0 0.0
    %37 = vmatpush1.msra.mxu0 %v33
    %38 = vmatprep.subr.mxu0 0.0
    %39 = vmatpush1.msra.mxu0 %v32
    %40 = vmatprep.subr.mxu0 0.0
    %41 = vmatpush1.msra.mxu0 %v31
    %42 = vmatprep.subr.mxu0 0.0
    %43 = vmatpush1.msra.mxu0 %v30
    %44 = vmatprep.subr.mxu0 0.0
    %45 = vmatpush1.msra.mxu0 %v29
    %46 = vmatprep.subr.mxu0 0.0
    %47 = vmatpush1.msra.mxu0 %v28
    %48 = vmatprep.subr.mxu0 0.0
    %49 = vmatpush1.msra.mxu0 %v27
    %50 = vmatprep.subr.mxu0 0.0
    %51 = vmatpush1.msra.mxu0 %v26
    %52 = vmatprep.subr.mxu0 0.0
    %53 = vmatpush1.msra.mxu0 %v25
    %54 = vmatprep.subr.mxu0 0.0
    %55 = vmatpush1.msra.mxu0 %v24
    %56 = vmatprep.subr.mxu0 0.0
    %57 = vmatpush1.msra.mxu0 %v23
    %58 = vmatprep.subr.mxu0 0.0
    %59 = vmatpush1.msra.mxu0 %v22
    %60 = vmatprep.subr.mxu0 0.0
    %61 = vmatpush1.msra.mxu0 %v21
    %62 = vmatprep.subr.mxu0 0.0
    %63 = vmatpush1.msra.mxu0 %v20
    %64 = vmatprep.subr.mxu0 0.0
    %65 = vmatpush1.msra.mxu0 %v19
    %66 = vmatprep.subr.mxu0 0.0
    %67 = vmatpush1.msra.mxu0 %v18
    %68 = vmatprep.subr.mxu0 0.0
    %69 = vmatpush2.msra.mxu0 0.0
    %70 = vmatprep.subr.mxu0 0.0
    %71 = vmatpush2.msra.mxu0 0.0
    %72 = vmatprep.subr.mxu0 0.0
    %73 = vmatpush2.msra.mxu0 0.0
    %74 = vmatprep.subr.mxu0 0.0
    %75 = vmatpush2.msra.mxu0 0.0
    %76 = vmatprep.subr.mxu0 0.0
    %77 = vmatpush2.msra.mxu0 0.0
    %78 = vmatprep.subr.mxu0 0.0
    %79 = vmatpush2.msra.mxu0 0.0
    %80 = vmatprep.subr.mxu0 0.0
    %81 = vmatpush2.msra.mxu0 0.0
    %82 = vmatprep.subr.mxu0 0.0
    %83 = vmatpush2.msra.mxu0 0.0
    %84 = vmatprep.subr.mxu0 0.0
    %85 = vmatpush2.msra.mxu0 0.0
    %86 = vmatprep.subr.mxu0 0.0
    %87 = vmatpush2.msra.mxu0 0.0
    %88 = vmatprep.subr.mxu0 0.0
    %89 = vmatpush2.msra.mxu0 0.0
    %90 = vmatprep.subr.mxu0 0.0
    %91 = vmatpush2.msra.mxu0 0.0
    %92 = vmatprep.subr.mxu0 0.0
    %93 = vmatpush2.msra.mxu0 0.0
    %94 = vmatprep.subr.mxu0 0.0
    %95 = vmatpush2.msra.mxu0 0.0
    %96 = vmatprep.subr.mxu0 0.0
    %97 = vmatpush2.msra.mxu0 0.0
    %98 = vmatprep.subr.mxu0 0.0
    %99 = vmatpush2.msra.mxu0 0.0
    %100 = vmatprep.mubr.f32.mxu0 0.0
    %101 = vmatmul.mubr.f32.gmra.mxu0 %v16
    %v102 = vpop.f32.mrf.mxu0
    %v103 = vadd.f32 %v35, %v102
    %v104 = vpop.f32.mrf.mxu0
    %105 = vmatprep.mubr.f32.mxu0 0.0
    %106 = vmatmul.mubr.f32.gmra.mxu0 %v17
    %v107 = vpop.f32.mrf.mxu0
    %v108 = vadd.f32 %v35, %v107
    %v109 = vpop.f32.mrf.mxu0
    %110 = vdwg.mxu0
    %vm111 = vcmask 523264
    %112 = vst.msk [vmem:[#allocation3] sm:$0xff] %vm111, %v103
    %113 = vst.msk [vmem:[#allocation3 + $0x8] sm:$0xff] %vm111, %v108
    // Predicated region
    $region14: #{tpu_custom_call.1} parent=1 // pred_check
      _
    $region15: #{tpu_custom_call.1} parent=1 // pred_check_branch
      %115 = sbr.rel (0) target = $region17
    $region16: #{tpu_custom_call.1} parent=1 // pred_region
      %s117 = ssub.s32 256, 256
      %118 = vsyncadd [#allocation4], %s117
      %s119 = sshll.u32 [#allocation3], 4
      %s120 = int_to_ptr.vmem [resolvable:$true] %s119
      %125 = dma.vmem_to_hbm [thread:$0]  %s120, 256, %s3, [#allocation4], 128, 128, 8
    $region17: #{tpu_custom_call.1} parent=1 // pred_fallthru
      _
    // Predicated region
    $region18: #{tpu_custom_call.1} parent=1 // pred_check
      _
    $region19: #{tpu_custom_call.1} parent=1 // pred_check_branch
      %127 = sbr.rel (0) target = $region21
    $region20: #{tpu_custom_call.1} parent=1 // pred_region
      %128 = dma.done [#allocation4], 256
    $region21: #{tpu_custom_call.1} parent=1 // pred_fallthru
      _
    %129 = vsyncpa [#allocation4], 1

</llo_original>
